<compile_context>
chip_gen: v5e
topology: v5e:2x2
jax: 0.10.0
libtpu: 0.0.40
codegen_flags: <defaults>
</compile_context>

<pallas_src>
import jax
import jax.numpy as jnp
from jax.experimental import pallas as pl
from jax.experimental.pallas import tpu as pltpu


def policy_hlp_kernel(x_ref, w1_ref, b1_ref, w2_ref, b2_ref, w3_ref, b3_ref, o_ref):
    # One batch tile per grid step; all three matmuls + bias + ReLU fused in VMEM.
    # Matmuls in bf16 (MXU native, single pass) with f32 accumulation; bias/ReLU in f32.
    x = x_ref[...].astype(jnp.bfloat16)
    h1 = jnp.dot(x, w1_ref[...], preferred_element_type=jnp.float32) + b1_ref[...]
    h1 = jnp.maximum(h1, 0.0).astype(jnp.bfloat16)
    h2 = jnp.dot(h1, w2_ref[...], preferred_element_type=jnp.float32) + b2_ref[...]
    h2 = jnp.maximum(h2, 0.0).astype(jnp.bfloat16)
    aw = jnp.dot(h2, w3_ref[...], preferred_element_type=jnp.float32) + b3_ref[...]
    o_ref[...] = jnp.maximum(aw, 0.0).astype(o_ref.dtype)


def _round_up(x, m):
    return ((x + m - 1) // m) * m


def policy_hlp_adapter_pallas(state, params, *, batch_tile=2048):
    """adapter_w = relu(mean_linear(relu(l2(relu(l1(state)))))).

    state: [B, num_inputs] f32.  params: dict of w1,b1,w2,b2,w3,b3 (f32).
    Returns [B, hidden_dim] f32.
    """
    B, num_inputs = state.shape
    hidden_dim = params["w1"].shape[1]

    # Batch tile: multiple of 8 (sublane). Cap at ~B/2 so the grid has >=2 steps whenever
    # B > 8, letting the "parallel" batch axis use both v7x TensorCores.
    half = _round_up(pl.cdiv(B, 2), 8)
    tb = max(8, (min(batch_tile, half) // 8) * 8)
    grid = (pl.cdiv(B, tb),)  # partial last tile is masked by Pallas (no pad / slice copies)

    # Cast weights to bf16 once here (resident in VMEM across all grid steps).
    w1 = params["w1"].astype(jnp.bfloat16)
    w2 = params["w2"].astype(jnp.bfloat16)
    w3 = params["w3"].astype(jnp.bfloat16)
    b1, b2, b3 = params["b1"], params["b2"], params["b3"]

    state_spec = pl.BlockSpec((tb, num_inputs), lambda i: (i, 0))
    # Weights / biases: same block every grid step -> stay VMEM-resident.
    w1_spec = pl.BlockSpec(w1.shape, lambda i: (0, 0))
    b1_spec = pl.BlockSpec(b1.shape, lambda i: (0, 0))
    w2_spec = pl.BlockSpec(w2.shape, lambda i: (0, 0))
    b2_spec = pl.BlockSpec(b2.shape, lambda i: (0, 0))
    w3_spec = pl.BlockSpec(w3.shape, lambda i: (0, 0))
    b3_spec = pl.BlockSpec(b3.shape, lambda i: (0, 0))
    out_spec = pl.BlockSpec((tb, hidden_dim), lambda i: (i, 0))

    # Advisory cost for XLA scheduling around this (HBM-bound) custom call.
    flops = 2 * B * (num_inputs * hidden_dim + 2 * hidden_dim * hidden_dim)
    weight_bytes = 2 * (num_inputs * hidden_dim + 2 * hidden_dim * hidden_dim) + 3 * 4 * hidden_dim
    bytes_accessed = B * num_inputs * 4 + B * hidden_dim * 4 + weight_bytes
    cost = pl.CostEstimate(flops=flops, transcendentals=0, bytes_accessed=bytes_accessed)

    # VMEM budget guard (v7x has 64 MiB physical / 32 MiB scoped default). Lane-padded,
    # double-buffered input/output tiles + resident bf16 weights + headroom for h1/h2.
    lane = 128
    in_lanes = _round_up(num_inputs, lane)
    hd_lanes = _round_up(hidden_dim, lane)
    vmem_est = (
        2 * tb * in_lanes * 4                                   # state tiles (f32, double-buffered)
        + 2 * tb * hd_lanes * 4                                 # output tiles (f32, double-buffered)
        + 2 * 2 * (_round_up(num_inputs, 16) + 2 * _round_up(hidden_dim, 16)) * hd_lanes  # bf16 W
        + 2 * tb * hd_lanes * 4                                 # headroom for h1/h2 intermediates
    )
    if vmem_est > (56 << 20):
        # TODO(synk): for very large hidden_dim, add a K/N tiling grid axis over the weights
        # instead of keeping them fully VMEM-resident.
        raise ValueError(
            f"estimated VMEM use {vmem_est >> 20} MiB exceeds the v7x budget; "
            "reduce batch_tile or tile hidden_dim"
        )
    compiler_params = pltpu.CompilerParams(
        dimension_semantics=("parallel",),
        vmem_limit_bytes=int(min(max(vmem_est + (8 << 20), 32 << 20), 56 << 20)),
    )

    return pl.pallas_call(
        policy_hlp_kernel,
        out_shape=jax.ShapeDtypeStruct((B, hidden_dim), jnp.float32),
        grid=grid,
        in_specs=[state_spec, w1_spec, b1_spec, w2_spec, b2_spec, w3_spec, b3_spec],
        out_specs=out_spec,
        compiler_params=compiler_params,
        cost_estimate=cost,
    )(state, w1, b1, w2, b2, w3, b3)


def xavier_uniform(key, shape):
    # shape = (fan_in, fan_out) for the x @ W convention (matches
    # torch.nn.init.xavier_uniform_ on the [out, in] weight, gain=1).
    fan_in, fan_out = shape
    limit = jnp.sqrt(6.0 / (fan_in + fan_out))
    return jax.random.uniform(key, shape, jnp.float32, -limit, limit)


def init_params(key, num_inputs, hidden_dim):
    k1, k2, k3 = jax.random.split(key, 3)
    return {
        "w1": xavier_uniform(k1, (num_inputs, hidden_dim)),
        "b1": jnp.zeros((1, hidden_dim), jnp.float32),
        "w2": xavier_uniform(k2, (hidden_dim, hidden_dim)),
        "b2": jnp.zeros((1, hidden_dim), jnp.float32),
        "w3": xavier_uniform(k3, (hidden_dim, hidden_dim)),  # the nn.Linear named "mean"
        "b3": jnp.zeros((1, hidden_dim), jnp.float32),
    }


def policy_hlp_adapter_ref(state, p, *, matmul_dtype=jnp.float32):
    """Pure-JAX reference. matmul_dtype=bfloat16 emulates the kernel's MXU numerics."""
    def dense_relu(x, w, b):
        y = jnp.dot(x.astype(matmul_dtype), w.astype(matmul_dtype),
                    preferred_element_type=jnp.float32) + b
        return jnp.maximum(y, 0.0)

    h1 = dense_relu(state, p["w1"], p["b1"])
    h2 = dense_relu(h1, p["w2"], p["b2"])
    return dense_relu(h2, p["w3"], p["b3"])


if __name__ == "__main__":
    key = jax.random.PRNGKey(0)
    k_state, k_params = jax.random.split(key)

    batch, num_inputs, hidden_dim = 8, 16, 32
    state = jax.random.normal(k_state, (batch, num_inputs), jnp.float32)
    params = init_params(k_params, num_inputs, hidden_dim)

    out = jax.block_until_ready(policy_hlp_adapter_pallas(state, params))
    assert out.shape == (batch, hidden_dim), out.shape
    ref_bf16 = policy_hlp_adapter_ref(state, params, matmul_dtype=jnp.bfloat16)
    ref_f32 = policy_hlp_adapter_ref(state, params, matmul_dtype=jnp.float32)
    assert jnp.allclose(out, ref_bf16, atol=2e-2, rtol=2e-2), "mismatch vs bf16 reference"
    assert jnp.allclose(out, ref_f32, atol=1e-1, rtol=1e-1), "mismatch vs f32 reference"

    # Batch that is not a multiple of the tile (or of 8): exercises the cdiv grid with a
    # masked partial last block and the >=2-step (v7x megacore) tiling path.
    batch2 = 1037
    state2 = jax.random.normal(jax.random.PRNGKey(1), (batch2, num_inputs), jnp.float32)
    out2 = jax.block_until_ready(policy_hlp_adapter_pallas(state2, params))
    assert out2.shape == (batch2, hidden_dim), out2.shape
    ref2 = policy_hlp_adapter_ref(state2, params, matmul_dtype=jnp.bfloat16)
    assert jnp.allclose(out2, ref2, atol=2e-2, rtol=2e-2), "mismatch vs reference (tiled)"

    print("KERNEL_OK")
</pallas_src>

<mosaic_0001>
module attributes {stable_mosaic.version = 11 : i64} {
  func.func @policy_hlp_kernel(%arg0: i32, %arg1: memref<8x16xf32, #tpu.memory_space<vmem>>, %arg2: memref<16x32xbf16, #tpu.memory_space<vmem>>, %arg3: memref<1x32xf32, #tpu.memory_space<vmem>>, %arg4: memref<32x32xbf16, #tpu.memory_space<vmem>>, %arg5: memref<1x32xf32, #tpu.memory_space<vmem>>, %arg6: memref<32x32xbf16, #tpu.memory_space<vmem>>, %arg7: memref<1x32xf32, #tpu.memory_space<vmem>>, %arg8: memref<8x32xf32, #tpu.memory_space<vmem>>) attributes {dimension_semantics = [#tpu.dimension_semantics<parallel>], iteration_bounds = array<i64: 1>, scalar_prefetch = 0 : i64, scratch_operands = 0 : i64, tpu.core_type = #tpu.core_type<tc>, window_params = [{transform_indices = @transform_0, window_bounds = array<i64: 8, 16>}, {pipeline_mode = #tpu.pipeline_mode<synchronous>, transform_indices = @transform_1, window_bounds = array<i64: 16, 32>}, {pipeline_mode = #tpu.pipeline_mode<synchronous>, transform_indices = @transform_2, window_bounds = array<i64: 1, 32>}, {pipeline_mode = #tpu.pipeline_mode<synchronous>, transform_indices = @transform_3, window_bounds = array<i64: 32, 32>}, {pipeline_mode = #tpu.pipeline_mode<synchronous>, transform_indices = @transform_4, window_bounds = array<i64: 1, 32>}, {pipeline_mode = #tpu.pipeline_mode<synchronous>, transform_indices = @transform_5, window_bounds = array<i64: 32, 32>}, {pipeline_mode = #tpu.pipeline_mode<synchronous>, transform_indices = @transform_6, window_bounds = array<i64: 1, 32>}, {transform_indices = @transform_7, window_bounds = array<i64: 8, 32>}]} {
    %c0 = arith.constant 0 : index
    %c0_0 = arith.constant 0 : index
    %0 = vector.load %arg1[%c0, %c0_0] : memref<8x16xf32, #tpu.memory_space<vmem>>, vector<8x16xf32>
    %1 = arith.truncf %0 : vector<8x16xf32> to vector<8x16xbf16>
    %c0_1 = arith.constant 0 : index
    %c0_2 = arith.constant 0 : index
    %2 = vector.load %arg2[%c0_1, %c0_2] : memref<16x32xbf16, #tpu.memory_space<vmem>>, vector<16x32xbf16>
    %cst = arith.constant dense<0.000000e+00> : vector<8x32xf32>
    %3 = tpu.matmul %1, %2, %cst {dimension_numbers = #tpu.dot_dimension_numbers<[1], [0], [0], [1], [0, 0, 1, 1], [], []>} : vector<8x16xbf16>, vector<16x32xbf16>, vector<8x32xf32> -> vector<8x32xf32>
    %c0_3 = arith.constant 0 : index
    %c0_4 = arith.constant 0 : index
    %4 = vector.load %arg3[%c0_3, %c0_4] : memref<1x32xf32, #tpu.memory_space<vmem>>, vector<1x32xf32>
    %5 = vector.broadcast %4 : vector<1x32xf32> to vector<8x32xf32>
    %6 = arith.addf %3, %5 : vector<8x32xf32>
    %cst_5 = arith.constant 0.000000e+00 : f32
    %7 = vector.broadcast %cst_5 : f32 to vector<8x32xf32>
    %8 = arith.maximumf %6, %7 : vector<8x32xf32>
    %9 = arith.truncf %8 : vector<8x32xf32> to vector<8x32xbf16>
    %c0_6 = arith.constant 0 : index
    %c0_7 = arith.constant 0 : index
    %10 = vector.load %arg4[%c0_6, %c0_7] : memref<32x32xbf16, #tpu.memory_space<vmem>>, vector<32x32xbf16>
    %cst_8 = arith.constant dense<0.000000e+00> : vector<8x32xf32>
    %11 = tpu.matmul %9, %10, %cst_8 {dimension_numbers = #tpu.dot_dimension_numbers<[1], [0], [0], [1], [0, 0, 1, 1], [], []>} : vector<8x32xbf16>, vector<32x32xbf16>, vector<8x32xf32> -> vector<8x32xf32>
    %c0_9 = arith.constant 0 : index
    %c0_10 = arith.constant 0 : index
    %12 = vector.load %arg5[%c0_9, %c0_10] : memref<1x32xf32, #tpu.memory_space<vmem>>, vector<1x32xf32>
    %13 = vector.broadcast %12 : vector<1x32xf32> to vector<8x32xf32>
    %14 = arith.addf %11, %13 : vector<8x32xf32>
    %cst_11 = arith.constant 0.000000e+00 : f32
    %15 = vector.broadcast %cst_11 : f32 to vector<8x32xf32>
    %16 = arith.maximumf %14, %15 : vector<8x32xf32>
    %17 = arith.truncf %16 : vector<8x32xf32> to vector<8x32xbf16>
    %c0_12 = arith.constant 0 : index
    %c0_13 = arith.constant 0 : index
    %18 = vector.load %arg6[%c0_12, %c0_13] : memref<32x32xbf16, #tpu.memory_space<vmem>>, vector<32x32xbf16>
    %cst_14 = arith.constant dense<0.000000e+00> : vector<8x32xf32>
    %19 = tpu.matmul %17, %18, %cst_14 {dimension_numbers = #tpu.dot_dimension_numbers<[1], [0], [0], [1], [0, 0, 1, 1], [], []>} : vector<8x32xbf16>, vector<32x32xbf16>, vector<8x32xf32> -> vector<8x32xf32>
    %c0_15 = arith.constant 0 : index
    %c0_16 = arith.constant 0 : index
    %20 = vector.load %arg7[%c0_15, %c0_16] : memref<1x32xf32, #tpu.memory_space<vmem>>, vector<1x32xf32>
    %21 = vector.broadcast %20 : vector<1x32xf32> to vector<8x32xf32>
    %22 = arith.addf %19, %21 : vector<8x32xf32>
    %cst_17 = arith.constant 0.000000e+00 : f32
    %23 = vector.broadcast %cst_17 : f32 to vector<8x32xf32>
    %24 = arith.maximumf %22, %23 : vector<8x32xf32>
    %c0_18 = arith.constant 0 : index
    %c0_19 = arith.constant 0 : index
    %25 = vector.load %arg8[%c0_18, %c0_19] : memref<8x32xf32, #tpu.memory_space<vmem>>, vector<8x32xf32>
    tpu.vector_store %arg8[%c0_18, %c0_19], %24 {strides = array<i32>} : memref<8x32xf32, #tpu.memory_space<vmem>>, vector<8x32xf32>,
    return
  }
  func.func @transform_0(%arg0: i32) -> (i32, i32) {
    %c0_i32 = arith.constant 0 : i32
    %c0_i32_0 = arith.constant 0 : i32
    return %arg0, %c0_i32 : i32, i32
  }
  func.func @transform_1(%arg0: i32) -> (i32, i32) {
    %c0_i32 = arith.constant 0 : i32
    %c0_i32_0 = arith.constant 0 : i32
    %c0_i32_1 = arith.constant 0 : i32
    return %c0_i32, %c0_i32_0 : i32, i32
  }
  func.func @transform_2(%arg0: i32) -> (i32, i32) {
    %c0_i32 = arith.constant 0 : i32
    %c0_i32_0 = arith.constant 0 : i32
    %c0_i32_1 = arith.constant 0 : i32
    return %c0_i32, %c0_i32_0 : i32, i32
  }
  func.func @transform_3(%arg0: i32) -> (i32, i32) {
    %c0_i32 = arith.constant 0 : i32
    %c0_i32_0 = arith.constant 0 : i32
    %c0_i32_1 = arith.constant 0 : i32
    return %c0_i32, %c0_i32_0 : i32, i32
  }
  func.func @transform_4(%arg0: i32) -> (i32, i32) {
    %c0_i32 = arith.constant 0 : i32
    %c0_i32_0 = arith.constant 0 : i32
    %c0_i32_1 = arith.constant 0 : i32
    return %c0_i32, %c0_i32_0 : i32, i32
  }
  func.func @transform_5(%arg0: i32) -> (i32, i32) {
    %c0_i32 = arith.constant 0 : i32
    %c0_i32_0 = arith.constant 0 : i32
    %c0_i32_1 = arith.constant 0 : i32
    return %c0_i32, %c0_i32_0 : i32, i32
  }
  func.func @transform_6(%arg0: i32) -> (i32, i32) {
    %c0_i32 = arith.constant 0 : i32
    %c0_i32_0 = arith.constant 0 : i32
    %c0_i32_1 = arith.constant 0 : i32
    return %c0_i32, %c0_i32_0 : i32, i32
  }
  func.func @transform_7(%arg0: i32) -> (i32, i32) {
    %c0_i32 = arith.constant 0 : i32
    %c0_i32_0 = arith.constant 0 : i32
    return %arg0, %c0_i32 : i32, i32
  }
}

</mosaic_0001>

<llo_original>
// kernel: tpu_custom_call.1
$region0: #{tpu_custom_call.1}
  #allocation0 [shape = 'u32[]', space=smem, size = 0x4, offset = 0x4, fixed_abs, tag = 'smem constant byte address 0x4 - core index']
  #allocation1 [shape = 'u32[72,128]{1,0:T(1,128)}', space=vmem, size = 0x9000, scoped, tag = 'internal scratch']
  %s0 = inlined_call_operand.hbm [shape: f32[8,16], index: 0, kind: input, shape index: {}]
  %s1 = inlined_call_operand.hbm [shape: bf16[16,32], index: 1, kind: input, shape index: {}]
  %s2 = inlined_call_operand.vmem [shape: f32[1,32], index: 2, kind: input, shape index: {}]
  %s3 = inlined_call_operand.hbm [shape: bf16[32,32], index: 3, kind: input, shape index: {}]
  %s4 = inlined_call_operand.vmem [shape: f32[1,32], index: 4, kind: input, shape index: {}]
  %s5 = inlined_call_operand.hbm [shape: bf16[32,32], index: 5, kind: input, shape index: {}]
  %s6 = inlined_call_operand.vmem [shape: f32[1,32], index: 6, kind: input, shape index: {}]
  %s7 = inlined_call_operand.hbm [shape: f32[8,32], index: 7, kind: output, shape index: {}]
  %s8 = sld [smem:[#allocation0]]
  $region54: #{tpu_custom_call.1} parent=0
    _
  %s10 = ssub.s32 1, %s8
  %s11 = scalar_select 0, %s10, %s8
  $region1: #{tpu_custom_call.1} parent=0
    #allocation2 [shape = 'u8[4096]{0}', space=vmem, size = 0x1000, scoped, tag = 'input window, operand 0, single buffered']
    #allocation3 [shape = 's32[1]{0}', space=sflag, size = 0x4, scoped, tag = 'scoped memory for tpu_custom_call.1']
    #allocation4 [shape = 's32[1]{0}', space=sflag, size = 0x4, scoped, tag = 'scoped memory for tpu_custom_call.1']
    #allocation5 [shape = 'u8[4096]{0}', space=vmem, size = 0x1000, scoped, tag = 'input window, operand 1, single buffered']
    #allocation6 [shape = 's32[1]{0}', space=sflag, size = 0x4, scoped, tag = 'scoped memory for tpu_custom_call.1']
    #allocation7 [shape = 'u8[8192]{0}', space=vmem, size = 0x2000, scoped, tag = 'input window, operand 3, single buffered']
    #allocation8 [shape = 'u8[8192]{0}', space=vmem, size = 0x2000, scoped, tag = 'input window, operand 5, single buffered']
    #allocation9 [shape = 's32[1]{0}', space=sflag, size = 0x4, scoped, tag = 'scoped memory for tpu_custom_call.1']
    #allocation10 [shape = 'u8[4096]{0}', space=vmem, size = 0x1000, scoped, tag = 'output window, operand 0, single buffered']
    %12 = vsyncpa [#allocation3], 0
    %13 = vsyncpa [#allocation6], 0
    %14 = vsyncpa [#allocation9], 0
    %15 = vsyncpa [#allocation4], 0
    // Predicated region
    $region2: #{tpu_custom_call.1} parent=1 // pred_check
      _
    $region3: #{tpu_custom_call.1} parent=1 // pred_check_branch
      %17 = sbr.rel (0) target = $region5
    $region4: #{tpu_custom_call.1} parent=1 // pred_region
      %19 = vsyncadd [#allocation3], 0
      %s21 = sshll.u32 %s0, 4
      %s22 = int_to_ptr.hbm [resolvable:$true] %s21
      %s23 = sshll.u32 [#allocation2], 4
      %s24 = int_to_ptr.vmem [resolvable:$true] %s23
      %26 = dma.hbm_to_vmem [thread:$0]  %s22, 128, %s24, [#allocation3]
    $region5: #{tpu_custom_call.1} parent=1 // pred_fallthru
      _
    // Predicated region
    $region6: #{tpu_custom_call.1} parent=1 // pred_check
      _
    $region7: #{tpu_custom_call.1} parent=1 // pred_check_branch
      %28 = sbr.rel (0) target = $region9
    $region8: #{tpu_custom_call.1} parent=1 // pred_region
      %30 = vsyncadd [#allocation6], 0
      %s31 = sshll.u32 %s1, 4
      %s32 = int_to_ptr.hbm [resolvable:$true] %s31
      %s33 = sshll.u32 [#allocation5], 4
      %s34 = int_to_ptr.vmem [resolvable:$true] %s33
      %39 = dma.hbm_to_vmem [thread:$0]  %s32, 128, %s34, [#allocation6], 64, 64, 4
    $region9: #{tpu_custom_call.1} parent=1 // pred_fallthru
      _
    // Predicated region
    $region10: #{tpu_custom_call.1} parent=1 // pred_check
      _
    $region11: #{tpu_custom_call.1} parent=1 // pred_check_branch
      %41 = sbr.rel (0) target = $region13
    $region12: #{tpu_custom_call.1} parent=1 // pred_region
      _
    $region13: #{tpu_custom_call.1} parent=1 // pred_fallthru
      _
    // Predicated region
    $region14: #{tpu_custom_call.1} parent=1 // pred_check
      _
    $region15: #{tpu_custom_call.1} parent=1 // pred_check_branch
      %43 = sbr.rel (0) target = $region17
    $region16: #{tpu_custom_call.1} parent=1 // pred_region
      %45 = vsyncadd [#allocation6], 0
      %s46 = sshll.u32 %s3, 4
      %s47 = int_to_ptr.hbm [resolvable:$true] %s46
      %s48 = sshll.u32 [#allocation7], 4
      %s49 = int_to_ptr.vmem [resolvable:$true] %s48
      %54 = dma.hbm_to_vmem [thread:$0]  %s47, 256, %s49, [#allocation6], 64, 64, 4
    $region17: #{tpu_custom_call.1} parent=1 // pred_fallthru
      _
    // Predicated region
    $region18: #{tpu_custom_call.1} parent=1 // pred_check
      _
    $region19: #{tpu_custom_call.1} parent=1 // pred_check_branch
      %56 = sbr.rel (0) target = $region21
    $region20: #{tpu_custom_call.1} parent=1 // pred_region
      _
    $region21: #{tpu_custom_call.1} parent=1 // pred_fallthru
      _
    // Predicated region
    $region22: #{tpu_custom_call.1} parent=1 // pred_check
      _
    $region23: #{tpu_custom_call.1} parent=1 // pred_check_branch
      %58 = sbr.rel (0) target = $region25
    $region24: #{tpu_custom_call.1} parent=1 // pred_region
      %60 = vsyncadd [#allocation9], 0
      %s61 = sshll.u32 %s5, 4
      %s62 = int_to_ptr.hbm [resolvable:$true] %s61
      %s63 = sshll.u32 [#allocation8], 4
      %s64 = int_to_ptr.vmem [resolvable:$true] %s63
      %69 = dma.hbm_to_vmem [thread:$0]  %s62, 256, %s64, [#allocation9], 64, 64, 4
    $region25: #{tpu_custom_call.1} parent=1 // pred_fallthru
      _
    // Predicated region
    $region26: #{tpu_custom_call.1} parent=1 // pred_check
      _
    $region27: #{tpu_custom_call.1} parent=1 // pred_check_branch
      %71 = sbr.rel (0) target = $region29
    $region28: #{tpu_custom_call.1} parent=1 // pred_region
      _
    $region29: #{tpu_custom_call.1} parent=1 // pred_fallthru
      _
    // Predicated region
    $region30: #{tpu_custom_call.1} parent=1 // pred_check
      _
    $region31: #{tpu_custom_call.1} parent=1 // pred_check_branch
      %73 = sbr.rel (0) target = $region33
    $region32: #{tpu_custom_call.1} parent=1 // pred_region
      %75 = dma.done [#allocation3], 128
    $region33: #{tpu_custom_call.1} parent=1 // pred_fallthru
      _
    // Predicated region
    $region34: #{tpu_custom_call.1} parent=1 // pred_check
      _
    $region35: #{tpu_custom_call.1} parent=1 // pred_check_branch
      %77 = sbr.rel (0) target = $region37
    $region36: #{tpu_custom_call.1} parent=1 // pred_region
      %79 = dma.done [#allocation6], 128
    $region37: #{tpu_custom_call.1} parent=1 // pred_fallthru
      _
    // Predicated region
    $region38: #{tpu_custom_call.1} parent=1 // pred_check
      _
    $region39: #{tpu_custom_call.1} parent=1 // pred_check_branch
      %81 = sbr.rel (0) target = $region41
    $region40: #{tpu_custom_call.1} parent=1 // pred_region
      %83 = dma.done [#allocation6], 256
    $region41: #{tpu_custom_call.1} parent=1 // pred_fallthru
      _
    // Predicated region
    $region42: #{tpu_custom_call.1} parent=1 // pred_check
      _
    $region43: #{tpu_custom_call.1} parent=1 // pred_check_branch
      %85 = sbr.rel (0) target = $region45
    $region44: #{tpu_custom_call.1} parent=1 // pred_region
      %87 = dma.done [#allocation9], 256
    $region45: #{tpu_custom_call.1} parent=1 // pred_fallthru
      _
    %v89 = vld [vmem:[#allocation2] sm:$0xff]
    %v90 = vpack.c.bf16 %v89, %v89
    %v91 = vld [vmem:[#allocation5] sm:$0xf]
    %v92 = vld [vmem:[#allocation5 + $0x4] sm:$0xf]
    %v93 = vld [vmem:[%s2] sm:$0x1]
    %v95 = vperm.slane %v93, 0
    %v99 = vunpack.c.l.b16 %v91
    %v100 = vunpack.c.l.b16 %v92
    %v101 = vpack.c.b16 %v100, %v99
    %vm103 = vcmask 130048
    %v105 = vsel %vm103, %v90, 0
    %107 = vmatpush.bf16.msra.mxu0 0
    %108 = vmatpush.bf16.msra.mxu0 0
    %109 = vmatpush.bf16.msra.mxu0 0
    %110 = vmatpush.bf16.msra.mxu0 0
    %111 = vmatpush.bf16.msra.mxu0 0
    %112 = vmatpush.bf16.msra.mxu0 0
    %113 = vmatpush.bf16.msra.mxu0 0
    %114 = vmatpush.bf16.msra.mxu0 %v101
    %115 = vmatmul.bf16.gmra.mxu0 %v105
    %v116 = vpop.f32.mrf.mxu0
    %v117 = vadd.f32 %v95, %v116
    %v118 = vpop.f32.mrf.mxu0
    %119 = vdwg.mxu0
    %v120 = vmax.f32 %v117, 0.0
    %v121 = vpack.c.bf16 %v120, %v120
    %v122 = vld [vmem:[#allocation7] sm:$0xf]
    %v123 = vld [vmem:[#allocation7 + $0x4] sm:$0xf]
    %v124 = vld [vmem:[#allocation7 + $0x8] sm:$0xf]
    %v125 = vld [vmem:[#allocation7 + $0xc] sm:$0xf]
    %v126 = vld [vmem:[%s4] sm:$0x1]
    %v128 = vperm.slane %v126, 0
    %v134 = vunpack.c.l.b16 %v122
    %v135 = vunpack.c.l.b16 %v123
    %v136 = vunpack.c.l.b16 %v124
    %v137 = vunpack.c.l.b16 %v125
    %v138 = vpack.c.b16 %v135, %v134
    %v139 = vpack.c.b16 %v137, %v136
    %vm142 = vcmask 261120
    %v144 = vsel %vm142, %v121, 0
    %146 = vmatpush.bf16.msra.mxu0 0
    %147 = vmatpush.bf16.msra.mxu0 0
    %148 = vmatpush.bf16.msra.mxu0 0
    %149 = vmatpush.bf16.msra.mxu0 0
    %150 = vmatpush.bf16.msra.mxu0 0
    %151 = vmatpush.bf16.msra.mxu0 0
    %152 = vmatpush.bf16.msra.mxu0 %v139
    %153 = vmatpush.bf16.msra.mxu0 %v138
    %154 = vmatmul.bf16.gmra.mxu0 %v144
    %v155 = vpop.f32.mrf.mxu0
    %v156 = vadd.f32 %v128, %v155
    %v157 = vpop.f32.mrf.mxu0
    %158 = vdwg.mxu0
    %v159 = vmax.f32 %v156, 0.0
    %v160 = vpack.c.bf16 %v159, %v159
    %v161 = vld [vmem:[#allocation8] sm:$0xf]
    %v162 = vld [vmem:[#allocation8 + $0x4] sm:$0xf]
    %v163 = vld [vmem:[#allocation8 + $0x8] sm:$0xf]
    %v164 = vld [vmem:[#allocation8 + $0xc] sm:$0xf]
    %v165 = vld [vmem:[%s6] sm:$0x1]
    %v167 = vperm.slane %v165, 0
    %v173 = vunpack.c.l.b16 %v161
    %v174 = vunpack.c.l.b16 %v162
    %v175 = vunpack.c.l.b16 %v163
    %v176 = vunpack.c.l.b16 %v164
    %v177 = vpack.c.b16 %v174, %v173
    %v178 = vpack.c.b16 %v176, %v175
    %v182 = vsel %vm142, %v160, 0
    %184 = vmatpush.bf16.msra.mxu0 0
    %185 = vmatpush.bf16.msra.mxu0 0
    %186 = vmatpush.bf16.msra.mxu0 0
    %187 = vmatpush.bf16.msra.mxu0 0
    %188 = vmatpush.bf16.msra.mxu0 0
    %189 = vmatpush.bf16.msra.mxu0 0
    %190 = vmatpush.bf16.msra.mxu0 %v178
    %191 = vmatpush.bf16.msra.mxu0 %v177
    %192 = vmatmul.bf16.gmra.mxu0 %v182
    %v193 = vpop.f32.mrf.mxu0
    %v194 = vadd.f32 %v167, %v193
    %v195 = vpop.f32.mrf.mxu0
    %196 = vdwg.mxu0
    %v197 = vmax.f32 %v194, 0.0
    %198 = vst.msk [vmem:[#allocation10] sm:$0xff] %vm142, %v197
    // Predicated region
    $region46: #{tpu_custom_call.1} parent=1 // pred_check
      _
    $region47: #{tpu_custom_call.1} parent=1 // pred_check_branch
      %200 = sbr.rel (0) target = $region49
    $region48: #{tpu_custom_call.1} parent=1 // pred_region
      %202 = vsyncadd [#allocation4], 0
      %s204 = sshll.u32 [#allocation10], 4
      %s205 = int_to_ptr.vmem [resolvable:$true] %s204
      %s206 = sshll.u32 %s7, 4
      %s207 = int_to_ptr.hbm [resolvable:$true] %s206
      %209 = dma.vmem_to_hbm [thread:$0]  %s205, 128, %s207, [#allocation4]
    $region49: #{tpu_custom_call.1} parent=1 // pred_fallthru
      _
    // Predicated region
    $region50: #{tpu_custom_call.1} parent=1 // pred_check
      _
    $region51: #{tpu_custom_call.1} parent=1 // pred_check_branch
      %211 = sbr.rel (0) target = $region53
    $region52: #{tpu_custom_call.1} parent=1 // pred_region
      %213 = dma.done [#allocation4], 128
    $region53: #{tpu_custom_call.1} parent=1 // pred_fallthru
      _
    %214 = vsyncpa [#allocation3], 1
    %215 = vsyncpa [#allocation6], 1
    %216 = vsyncpa [#allocation9], 1
    %217 = vsyncpa [#allocation4], 1

</llo_original>
